<compile_context>
chip_gen: v7x
topology: tpu7x:2x2x1
jax: 0.10.0
libtpu: 0.0.40
codegen_flags: <defaults>
</compile_context>

<pallas_src>
import math

import jax
import jax.numpy as jnp
from jax.experimental import pallas as pl
from jax.experimental.pallas import tpu as pltpu


def _conv1x1_tanh_kernel(x_ref, w_ref, b_ref, o_ref):
    # x_ref: (C_in, TC)   spatial tile of one batch element (lane-dense)
    # w_ref: (C_out, C_in) full 1x1 conv weight (tiny, resident every step)
    # b_ref: (C_out, 1)   bias, broadcast over lanes
    # o_ref: (C_out, TC)
    x = x_ref[...].astype(jnp.float32)
    w = w_ref[...].astype(jnp.float32)
    b = b_ref[...].astype(jnp.float32)
    acc = jnp.dot(w, x, preferred_element_type=jnp.float32)  # MXU: (C_out, TC)
    o_ref[...] = jnp.tanh(acc + b).astype(o_ref.dtype)       # fused tanh epilogue (EUP)


def _round_up(x, m):
    return ((x + m - 1) // m) * m


def _choose_col_tile(hw_pad, target=512):
    """Largest multiple of 128 that divides hw_pad and is <= target."""
    tc = min(target, hw_pad)
    tc -= tc % 128
    while tc > 128 and hw_pad % tc != 0:
        tc -= 128
    return max(tc, 128)


def conv1x1_tanh(x, weight, bias, *, col_tile=512):
    """x: (N, C_in, H, W) NCHW;  weight: (C_out, C_in);  bias: (C_out,)."""
    n, c_in, h, w = x.shape
    c_out = weight.shape[0]
    hw = h * w

    # Free reshape: (N, C_in, H, W) -> (N, C_in, H*W).
    x3 = x.reshape(n, c_in, hw)

    # Pad the lane axis to a multiple of 128 so stores are lane-dense.
    hw_pad = _round_up(hw, 128)
    if hw_pad != hw:
        x3 = jnp.pad(x3, ((0, 0), (0, 0), (0, hw_pad - hw)))

    tc = _choose_col_tile(hw_pad, col_tile)
    grid = (n, hw_pad // tc)

    out3 = pl.pallas_call(
        _conv1x1_tanh_kernel,
        out_shape=jax.ShapeDtypeStruct((n, c_out, hw_pad), x.dtype),
        grid=grid,
        in_specs=[
            # batch dim squeezed out -> kernel sees (C_in, TC)
            pl.BlockSpec((None, c_in, tc), lambda b, j: (b, 0, j)),
            pl.BlockSpec((c_out, c_in), lambda b, j: (0, 0)),
            pl.BlockSpec((c_out, 1), lambda b, j: (0, 0)),
        ],
        out_specs=pl.BlockSpec((None, c_out, tc), lambda b, j: (b, 0, j)),
        compiler_params=pltpu.CompilerParams(
            dimension_semantics=("parallel", "parallel"),
        ),
    )(x3, weight, bias.reshape(c_out, 1))

    if hw_pad != hw:
        out3 = out3[:, :, :hw]
    return out3.reshape(n, c_out, h, w)


class ConvlutioanlOut:
    """Pallas port of Networks/net.py::Convlutioanl_out (1x1 conv + tanh)."""

    def __init__(self, in_channel, out_channel, key=None, dtype=jnp.float32):
        if key is None:
            key = jax.random.PRNGKey(0)
        kw, kb = jax.random.split(key)
        # PyTorch Conv2d default init: uniform(-1/sqrt(fan_in), 1/sqrt(fan_in)),
        # fan_in = in_channel * 1 * 1 for a 1x1 kernel.
        bound = 1.0 / math.sqrt(in_channel)
        self.weight = jax.random.uniform(
            kw, (out_channel, in_channel), dtype, minval=-bound, maxval=bound
        )
        self.bias = jax.random.uniform(
            kb, (out_channel,), dtype, minval=-bound, maxval=bound
        )

    def __call__(self, x):
        return conv1x1_tanh(x, self.weight, self.bias)


def _reference(x, weight, bias):
    y = jnp.einsum("oi,nihw->nohw", weight, x) + bias.reshape(1, -1, 1, 1)
    return jnp.tanh(y)


if __name__ == "__main__":
    key = jax.random.PRNGKey(0)
    kx, kp = jax.random.split(key)

    N, C_IN, C_OUT, H, W = 2, 4, 1, 16, 16
    x = jax.random.normal(kx, (N, C_IN, H, W), dtype=jnp.float32)

    layer = ConvlutioanlOut(C_IN, C_OUT, key=kp)
    y = jax.block_until_ready(layer(x))

    ref = _reference(x, layer.weight, layer.bias)

    assert y.shape == (N, C_OUT, H, W), f"bad shape {y.shape}"
    if jnp.allclose(y, ref, atol=1e-5, rtol=1e-5):
        print("KERNEL_OK")
    else:
        print("MISMATCH, max abs err =", float(jnp.max(jnp.abs(y - ref))))
</pallas_src>

<mosaic_0001>
module attributes {stable_mosaic.version = 11 : i64} {
  func.func @_conv1x1_tanh_kernel(%arg0: i32, %arg1: i32, %arg2: memref<1x4x256xf32, #tpu.memory_space<vmem>>, %arg3: memref<1x4xf32, #tpu.memory_space<vmem>>, %arg4: memref<1x1xf32, #tpu.memory_space<vmem>>, %arg5: memref<1x1x256xf32, #tpu.memory_space<vmem>>) attributes {dimension_semantics = [#tpu.dimension_semantics<parallel>, #tpu.dimension_semantics<parallel>], iteration_bounds = array<i64: 2, 1>, scalar_prefetch = 0 : i64, scratch_operands = 0 : i64, tpu.core_type = #tpu.core_type<tc>, window_params = [{transform_indices = @transform_0, window_bounds = array<i64: 1, 4, 256>}, {pipeline_mode = #tpu.pipeline_mode<synchronous>, transform_indices = @transform_1, window_bounds = array<i64: 1, 4>}, {pipeline_mode = #tpu.pipeline_mode<synchronous>, transform_indices = @transform_2, window_bounds = array<i64: 1, 1>}, {transform_indices = @transform_3, window_bounds = array<i64: 1, 1, 256>}]} {
    %c0 = arith.constant 0 : index
    %c0_0 = arith.constant 0 : index
    %c0_1 = arith.constant 0 : index
    %0 = vector.load %arg2[%c0, %c0_0, %c0_1] : memref<1x4x256xf32, #tpu.memory_space<vmem>>, vector<1x4x256xf32>
    %1 = vector.shape_cast %0 : vector<1x4x256xf32> to vector<4x256xf32>
    %c0_2 = arith.constant 0 : index
    %c0_3 = arith.constant 0 : index
    %2 = vector.load %arg3[%c0_2, %c0_3] : memref<1x4xf32, #tpu.memory_space<vmem>>, vector<1x4xf32>
    %c0_4 = arith.constant 0 : index
    %c0_5 = arith.constant 0 : index
    %3 = vector.load %arg4[%c0_4, %c0_5] : memref<1x1xf32, #tpu.memory_space<vmem>>, vector<1x1xf32>
    %cst = arith.constant dense<0.000000e+00> : vector<1x256xf32>
    %4 = tpu.matmul %2, %1, %cst {dimension_numbers = #tpu.dot_dimension_numbers<[1], [0], [0], [1], [0, 0, 1, 1], [], []>} : vector<1x4xf32>, vector<4x256xf32>, vector<1x256xf32> -> vector<1x256xf32>
    %5 = vector.broadcast %3 : vector<1x1xf32> to vector<1x256xf32>
    %6 = arith.addf %4, %5 : vector<1x256xf32>
    %7 = math.tanh %6 : vector<1x256xf32>
    %c0_6 = arith.constant 0 : index
    %c0_7 = arith.constant 0 : index
    %c0_8 = arith.constant 0 : index
    %8 = vector.load %arg5[%c0_6, %c0_7, %c0_8] : memref<1x1x256xf32, #tpu.memory_space<vmem>>, vector<1x1x256xf32>
    %9 = vector.shape_cast %8 : vector<1x1x256xf32> to vector<1x256xf32>
    %10 = vector.shape_cast %7 : vector<1x256xf32> to vector<1x1x256xf32>
    tpu.vector_store %arg5[%c0_6, %c0_7, %c0_8], %10 {strides = array<i32>} : memref<1x1x256xf32, #tpu.memory_space<vmem>>, vector<1x1x256xf32>,
    return
  }
  func.func @transform_0(%arg0: i32, %arg1: i32) -> (i32, i32, i32) {
    %c0_i32 = arith.constant 0 : i32
    %c0_i32_0 = arith.constant 0 : i32
    return %arg0, %c0_i32, %arg1 : i32, i32, i32
  }
  func.func @transform_1(%arg0: i32, %arg1: i32) -> (i32, i32) {
    %c0_i32 = arith.constant 0 : i32
    %c0_i32_0 = arith.constant 0 : i32
    %c0_i32_1 = arith.constant 0 : i32
    return %c0_i32, %c0_i32_0 : i32, i32
  }
  func.func @transform_2(%arg0: i32, %arg1: i32) -> (i32, i32) {
    %c0_i32 = arith.constant 0 : i32
    %c0_i32_0 = arith.constant 0 : i32
    %c0_i32_1 = arith.constant 0 : i32
    return %c0_i32, %c0_i32_0 : i32, i32
  }
  func.func @transform_3(%arg0: i32, %arg1: i32) -> (i32, i32, i32) {
    %c0_i32 = arith.constant 0 : i32
    %c0_i32_0 = arith.constant 0 : i32
    return %arg0, %c0_i32, %arg1 : i32, i32, i32
  }
}

</mosaic_0001>

<llo_original>
// kernel: tpu_custom_call.1
$region0: #{tpu_custom_call.1}
  #allocation0 [shape = 'u32[]', space=smem, size = 0x4, offset = 0x4, fixed_abs, tag = 'smem constant byte address 0x4 - core index']
  #allocation1 [shape = 'u32[144,128]{1,0:T(1,128)}', space=vmem, size = 0x12000, scoped, tag = 'internal scratch']
  #allocation2 [shape = 'f32[1,1]{1,0:T(1,128)S(1)}', space=vmem, size = 0x200, scoped, tag = 'scoped memory for tpu_custom_call.1']
  %s0 = inlined_call_operand.hbm [shape: f32[2,4,256], index: 0, kind: input, shape index: {}]
  %s1 = inlined_call_operand.vmem [shape: f32[1,4], index: 1, kind: input, shape index: {}]
  %s2 = inlined_call_operand.<no memory space> [shape: f32[1,1], index: 2, kind: input, shape index: {}]
  %s3 = inlined_call_operand.hbm [shape: f32[2,1,256], index: 3, kind: output, shape index: {}]
  %s4 = sld [smem:[#allocation0]]
  $region49: #{tpu_custom_call.1} parent=0
    _
  %s6 = ssub.s32 1, %s4
  %s7 = scalar_select 0, %s6, %s4
  %v8 = vstv %s2
  %9 = vst [vmem:[#allocation2] sm:$0x1] %v8
  $region1: #{tpu_custom_call.1} parent=0
    #allocation3 [shape = 'u8[8192]{0}', space=vmem, size = 0x2000, scoped, tag = 'input window, operand 0']
    #allocation4 [shape = 's32[2]{0}', space=sflag, size = 0x8, scoped, tag = 'scoped memory for tpu_custom_call.1']
    #allocation5 [shape = 's32[2]{0}', space=sflag, size = 0x8, scoped, tag = 'scoped memory for tpu_custom_call.1']
    #allocation6 [shape = 'u8[2048]{0}', space=vmem, size = 0x800, scoped, tag = 'output window, operand 0']
    %10 = vsyncpa [#allocation4], 0
    %s11 = scalar_lea.sflag [#allocation4], 1
    %12 = vsyncpa %s11, 0
    %13 = vsyncpa [#allocation5], 0
    %s14 = scalar_lea.sflag [#allocation5], 1
    %15 = vsyncpa %s14, 0
    loop: start=0, step=1, limit=4
    $region2: #{tpu_custom_call.1} parent=1 // loop_pre_header
      _
    $region3: #{tpu_custom_call.1} parent=1 // loop_header
      %s17 = sphi 0, %s21
      %p18 = scmp.ge.s32.totalorder %s17, 4
      %s24 = sphi 0, %s36
      %s25 = sphi 0, %s32
      %s26 = sphi 0, %s24
      %s27 = sphi 0, %s25
      %s28 = sphi 0, %s26
      %s29 = sphi 0, %s27
      %s41 = sphi 0, %s43
      %s44 = sphi 0, %s41
      %s45 = sphi 0, %s44
      %s61 = sphi 0, %s45
      %s65 = sphi 0, %s65
      %s67 = sphi 0, %s65
      %s68 = sphi 0, %s67
      %s82 = sphi 0, %s68
      %s86 = sphi 0, %s86
      %s88 = sphi 0, %s86
      %s89 = sphi 0, %s88
      %s103 = sphi 0, %s89
      %s111 = sphi 0, %s113
      %s114 = sphi 0, %s111
      %s115 = sphi 0, %s114
      %s131 = sphi 0, %s115
    $region4: #{tpu_custom_call.1} parent=1 // loop_header_branch
      %20 = sbr.rel (%p18) target = $region8
    $region5: #{tpu_custom_call.1} parent=1 // loop_body
      %s22 = ssub.s32 %s17, 1
      %s23 = ssub.s32 %s17, 2
      %s30 = sadd.s32 1, %s25
      %p31 = scmp.ge.s32.totalorder %s30, 1
      %s32 = scalar_select %p31, 0, %s30
      %s33 = sadd.s32 1, %s24
      %s34 = scalar_select %p31, %s33, %s24
      %p35 = scmp.ge.s32.totalorder %s34, 2
      %s36 = scalar_select %p35, 0, %s34
      %s37 = ssub.s32 %s24, %s36
      %s38 = ssub.s32 %s25, %s32
      %s39 = sor.u32 %s37, %s38
      %p40 = scmp.eq.s32.totalorder %s39, 0
      %s42 = sadd.s32 %s41, 1
      %s43 = scalar_select %p40, %s41, %s42
      %p46 = pneg %p40
      %p47 = scmp.eq.s32.totalorder %s17, 1
      %p48 = por %p46, %p47
      %p49 = scmp.ne.s32.totalorder %s41, %s44
      %p50 = scmp.eq.s32.totalorder %s17, 0
      %p51 = por %p49, %p50
      %p52 = scmp.ne.s32.totalorder %s41, %s44
      %p53 = scmp.eq.s32.totalorder %s22, 1
      %p54 = por %p52, %p53
      %p55 = scmp.ne.s32.totalorder %s44, %s45
      %p56 = scmp.eq.s32.totalorder %s22, 0
      %p57 = por %p55, %p56
      %p58 = scmp.ne.s32.totalorder %s44, %s45
      %p59 = scmp.eq.s32.totalorder %s23, 1
      %p60 = por %p58, %p59
      %p62 = scmp.ne.s32.totalorder %s45, %s61
      %p63 = scmp.eq.s32.totalorder %s23, 0
      %p64 = por %p62, %p63
      %s66 = sadd.s32 %s65, 1
      %p69 = scmp.eq.s32.totalorder %s17, 1
      %p70 = scmp.ne.s32.totalorder %s65, %s67
      %p71 = scmp.eq.s32.totalorder %s17, 0
      %p72 = por %p70, %p71
      %p73 = scmp.ne.s32.totalorder %s65, %s67
      %p74 = scmp.eq.s32.totalorder %s22, 1
      %p75 = por %p73, %p74
      %p76 = scmp.ne.s32.totalorder %s67, %s68
      %p77 = scmp.eq.s32.totalorder %s22, 0
      %p78 = por %p76, %p77
      %p79 = scmp.ne.s32.totalorder %s67, %s68
      %p80 = scmp.eq.s32.totalorder %s23, 1
      %p81 = por %p79, %p80
      %p83 = scmp.ne.s32.totalorder %s68, %s82
      %p84 = scmp.eq.s32.totalorder %s23, 0
      %p85 = por %p83, %p84
      %s87 = sadd.s32 %s86, 1
      %p90 = scmp.eq.s32.totalorder %s17, 1
      %p91 = scmp.ne.s32.totalorder %s86, %s88
      %p92 = scmp.eq.s32.totalorder %s17, 0
      %p93 = por %p91, %p92
      %p94 = scmp.ne.s32.totalorder %s86, %s88
      %p95 = scmp.eq.s32.totalorder %s22, 1
      %p96 = por %p94, %p95
      %p97 = scmp.ne.s32.totalorder %s88, %s89
      %p98 = scmp.eq.s32.totalorder %s22, 0
      %p99 = por %p97, %p98
      %p100 = scmp.ne.s32.totalorder %s88, %s89
      %p101 = scmp.eq.s32.totalorder %s23, 1
      %p102 = por %p100, %p101
      %p104 = scmp.ne.s32.totalorder %s89, %s103
      %p105 = scmp.eq.s32.totalorder %s23, 0
      %p106 = por %p104, %p105
      %s107 = ssub.s32 %s24, %s36
      %s108 = ssub.s32 %s25, %s32
      %s109 = sor.u32 %s107, %s108
      %p110 = scmp.eq.s32.totalorder %s109, 0
      %s112 = sadd.s32 %s111, 1
      %s113 = scalar_select %p110, %s111, %s112
      %p116 = pneg %p110
      %p117 = scmp.eq.s32.totalorder %s17, 1
      %p118 = por %p116, %p117
      %p119 = scmp.ne.s32.totalorder %s111, %s114
      %p120 = scmp.eq.s32.totalorder %s17, 0
      %p121 = por %p119, %p120
      %p122 = scmp.ne.s32.totalorder %s111, %s114
      %p123 = scmp.eq.s32.totalorder %s22, 1
      %p124 = por %p122, %p123
      %p125 = scmp.ne.s32.totalorder %s114, %s115
      %p126 = scmp.eq.s32.totalorder %s22, 0
      %p127 = por %p125, %p126
      %p128 = scmp.ne.s32.totalorder %s114, %s115
      %p129 = scmp.eq.s32.totalorder %s23, 1
      %p130 = por %p128, %p129
      %p132 = scmp.ne.s32.totalorder %s115, %s131
      %p133 = scmp.eq.s32.totalorder %s23, 0
      %p134 = por %p132, %p133
      %p135 = scmp.le.s32.totalorder 1, %s17
      %p136 = scmp.lt.s32.totalorder %s17, 3
      %p137 = pnand %p135, %p136
      %p138 = pneg %p137
      // Predicated region
      $region9: #{tpu_custom_call.1} parent=5 // pred_check
        _
      $region10: #{tpu_custom_call.1} parent=5 // pred_check_branch
        %140 = sbr.rel (%p137) target = $region12
      $region11: #{tpu_custom_call.1} parent=5 // pred_region
        %s141 = ssub.s32 %s17, 1
        // Predicated region
        $region13: #{tpu_custom_call.1} parent=11 // pred_check
          %p142 = pneg %p78
        $region14: #{tpu_custom_call.1} parent=11 // pred_check_branch
          %144 = sbr.rel (%p142) target = $region16
        $region15: #{tpu_custom_call.1} parent=11 // pred_region
          _
        $region16: #{tpu_custom_call.1} parent=11 // pred_fallthru
          _
        // Predicated region
        $region17: #{tpu_custom_call.1} parent=11 // pred_check
          %p145 = pneg %p99
        $region18: #{tpu_custom_call.1} parent=11 // pred_check_branch
          %147 = sbr.rel (%p145) target = $region20
        $region19: #{tpu_custom_call.1} parent=11 // pred_region
          _
        $region20: #{tpu_custom_call.1} parent=11 // pred_fallthru
          _
      $region12: #{tpu_custom_call.1} parent=5 // pred_fallthru
        _
      %p148 = scmp.lt.s32.totalorder %s17, 2
      // Predicated region
      $region21: #{tpu_custom_call.1} parent=5 // pred_check
        %p149 = pneg %p148
      $region22: #{tpu_custom_call.1} parent=5 // pred_check_branch
        %151 = sbr.rel (%p149) target = $region24
      $region23: #{tpu_custom_call.1} parent=5 // pred_region
        // Predicated region
        $region25: #{tpu_custom_call.1} parent=23 // pred_check
          %p152 = pneg %p51
        $region26: #{tpu_custom_call.1} parent=23 // pred_check_branch
          %154 = sbr.rel (%p152) target = $region28
        $region27: #{tpu_custom_call.1} parent=23 // pred_region
          %s155 = sand.u32 %s41, 1
          %s156 = scalar_lea.sflag [#allocation4], %s155
          %s157 = sand.u32 %s41, 1
          %s158 = smul.addr %s157, 8
          %s159 = scalar_lea.vmem [#allocation3], %s158
          %s160 = smul.u32 2, %s25
          %s162 = ssub.s32 128, 128
          %163 = vsyncadd %s156, %s162
          %s164 = smul.addr %s24, 2
          %s165 = sadd.s32 %s160, %s164
          %s166 = smul.addr %s165, 64
          %s167 = scalar_lea.hbm %s0, %s166
          %s169 = sshll.u32 %s159, 4
          %s170 = int_to_ptr.vmem [resolvable:$true] %s169
          %172 = dma.hbm_to_vmem [thread:$0]  %s167, 128, %s170, %s156
        $region28: #{tpu_custom_call.1} parent=23 // pred_fallthru
          _
      $region24: #{tpu_custom_call.1} parent=5 // pred_fallthru
        _
      %p173 = scmp.le.s32.totalorder 1, %s17
      %p174 = scmp.lt.s32.totalorder %s17, 3
      %p175 = pnand %p173, %p174
      %p176 = pneg %p175
      // Predicated region
      $region29: #{tpu_custom_call.1} parent=5 // pred_check
        _
      $region30: #{tpu_custom_call.1} parent=5 // pred_check_branch
        %178 = sbr.rel (%p175) target = $region32
      $region31: #{tpu_custom_call.1} parent=5 // pred_region
        %s179 = ssub.s32 %s17, 1
        %s180 = sand.u32 %s44, 1
        %s181 = scalar_lea.sflag [#allocation4], %s180
        %s182 = sand.u32 %s44, 1
        %s183 = smul.addr %s182, 8
        %s184 = scalar_lea.vmem [#allocation3], %s183
        // Predicated region
        $region33: #{tpu_custom_call.1} parent=31 // pred_check
          %p185 = pneg %p57
        $region34: #{tpu_custom_call.1} parent=31 // pred_check_branch
          %187 = sbr.rel (%p185) target = $region36
        $region35: #{tpu_custom_call.1} parent=31 // pred_region
          %188 = dma.done %s181, 128
        $region36: #{tpu_custom_call.1} parent=31 // pred_fallthru
          _
        %s189 = sand.u32 %s44, 1
        %s190 = scalar_lea.sflag [#allocation4], %s189
        %s191 = sand.u32 %s44, 1
        %s192 = smul.addr %s191, 8
        %s193 = scalar_lea.vmem [#allocation3], %s192
        %p194 = pneg %p57
        %p195 = pneg %p54
        %p196 = pneg %p78
        %p197 = pneg %p75
        %p198 = pneg %p99
        %p199 = pneg %p96
        %p200 = pneg %p127
        %p201 = pneg %p124
        %s202 = sand.u32 %s114, 1
        %s203 = scalar_lea.sflag [#allocation5], %s202
        %s204 = sand.u32 %s114, 1
        %s205 = smul.addr %s204, 2
        %s206 = scalar_lea.vmem [#allocation6], %s205
        %s207 = smul.u32 2, %s27
        %s208 = smul.u32 2, %s27
        %v209 = vld [vmem:[%s184] sm:$0xff]
        %v210 = vld [vmem:[%s1] sm:$0x1]
        %v211 = vld [vmem:[#allocation2] sm:$0x1]
        %213 = vset.pattern.permute.xlu0 0
        %214 = vperm.xlu0 %213, %v211
        %v215 = vpop.permute.xlu0 %214
        %v217 = vlaneseq
        %v218 = vshrl.u32 %v217, 7
        %v219 = vsub.s32 0, %v218
        %v220 = vrot.slane %v215, %v219
        %v222 = vcombine.high %v209, %v209
        %vm223 = vcmask 31744
        %v225 = vsel %vm223, %v210, 0
        %vm227 = vcmask 1043456
        %v228 = vsel %vm227, %v209, 0
        %v230 = vsel %vm227, %v222, 0
        %232 = vmatprep.subr.mxu0 %v230
        %233 = vmatpush1.msra.mxu0 %v228
        %234 = vmatprep.subr.mxu0 0.0
        %235 = vmatpush1.msra.mxu0 0.0
        %236 = vmatprep.subr.mxu0 0.0
        %237 = vmatpush1.msra.mxu0 0.0
        %238 = vmatprep.subr.mxu0 0.0
        %239 = vmatpush1.msra.mxu0 0.0
        %240 = vmatprep.subr.mxu0 0.0
        %241 = vmatpush1.msra.mxu0 0.0
        %242 = vmatprep.subr.mxu0 0.0
        %243 = vmatpush1.msra.mxu0 0.0
        %244 = vmatprep.subr.mxu0 0.0
        %245 = vmatpush1.msra.mxu0 0.0
        %246 = vmatprep.subr.mxu0 0.0
        %247 = vmatpush1.msra.mxu0 0.0
        %248 = vmatprep.subr.mxu0 0.0
        %249 = vmatpush1.msra.mxu0 0.0
        %250 = vmatprep.subr.mxu0 0.0
        %251 = vmatpush1.msra.mxu0 0.0
        %252 = vmatprep.subr.mxu0 0.0
        %253 = vmatpush1.msra.mxu0 0.0
        %254 = vmatprep.subr.mxu0 0.0
        %255 = vmatpush1.msra.mxu0 0.0
        %256 = vmatprep.subr.mxu0 0.0
        %257 = vmatpush1.msra.mxu0 0.0
        %258 = vmatprep.subr.mxu0 0.0
        %259 = vmatpush1.msra.mxu0 0.0
        %260 = vmatprep.subr.mxu0 0.0
        %261 = vmatpush1.msra.mxu0 0.0
        %262 = vmatprep.subr.mxu0 0.0
        %263 = vmatpush1.msra.mxu0 0.0
        %264 = vmatprep.subr.mxu0 0.0
        %265 = vmatpush1.msra.mxu0 0.0
        %266 = vmatprep.subr.mxu0 0.0
        %267 = vmatpush1.msra.mxu0 0.0
        %268 = vmatprep.subr.mxu0 0.0
        %269 = vmatpush1.msra.mxu0 0.0
        %270 = vmatprep.subr.mxu0 0.0
        %271 = vmatpush1.msra.mxu0 0.0
        %272 = vmatprep.subr.mxu0 0.0
        %273 = vmatpush1.msra.mxu0 0.0
        %274 = vmatprep.subr.mxu0 0.0
        %275 = vmatpush1.msra.mxu0 0.0
        %276 = vmatprep.subr.mxu0 0.0
        %277 = vmatpush1.msra.mxu0 0.0
        %278 = vmatprep.subr.mxu0 0.0
        %279 = vmatpush1.msra.mxu0 0.0
        %280 = vmatprep.subr.mxu0 0.0
        %281 = vmatpush1.msra.mxu0 0.0
        %282 = vmatprep.subr.mxu0 0.0
        %283 = vmatpush1.msra.mxu0 0.0
        %284 = vmatprep.subr.mxu0 0.0
        %285 = vmatpush1.msra.mxu0 0.0
        %286 = vmatprep.subr.mxu0 0.0
        %287 = vmatpush1.msra.mxu0 0.0
        %288 = vmatprep.subr.mxu0 0.0
        %289 = vmatpush1.msra.mxu0 0.0
        %290 = vmatprep.subr.mxu0 0.0
        %291 = vmatpush1.msra.mxu0 0.0
        %292 = vmatprep.subr.mxu0 0.0
        %293 = vmatpush1.msra.mxu0 0.0
        %294 = vmatprep.subr.mxu0 0.0
        %295 = vmatpush1.msra.mxu0 0.0
        %296 = vmatprep.mubr.f32.mxu0 0.0
        %297 = vmatmul.mubr.f32.gmra.mrb[0].mxu0 %v225
        %v298 = vpop.f32.mrb[0].mxu0
        %v299 = vadd.f32 %v220, %v298
        %v300 = vpop.f32.mrb[0].mxu0
        %v301 = vadd.f32 %v220, %v300
        %302 = vdwg.mxu0
        %v303 = vtanh.pop %v299
        %v304 = vtanh.pop %v301
        %v307 = vcombine.low %v303, %v304
        %v309 = vunpack.c.l.s4 1966171168
        %v310 = vunpack.c.0.s8 %v309
        %v311 = vlaneseq
        %v312 = vshrl.u32 %v311, 7
        %v313 = vsub.s32 %v310, %v312
        %v314 = vrot.slane %v307, %v313
        %v316 = vunpack.c.l.s4 1966171168
        %v317 = vunpack.c.0.s8 %v316
        %v318 = vlaneseq
        %v319 = vshrl.u32 %v318, 7
        %v320 = vsub.s32 %v317, %v319
        %v321 = vrot.slane %v314, %v320
        %v323 = vlaneseq
        %vm324 = vcmp.ge.s32.totalorder %v323, 0
        %vm325 = vcmp.lt.s32.totalorder %v323, 256
        %vm326 = vmand %vm324, %vm325
        %327 = vst.msk [vmem:[%s206] sm:$0x3] %vm326, %v321
        %s328 = sand.u32 %s114, 1
        %s329 = scalar_lea.sflag [#allocation5], %s328
        %s330 = sand.u32 %s114, 1
        %s331 = smul.addr %s330, 2
        %s332 = scalar_lea.vmem [#allocation6], %s331
        // Predicated region
        $region37: #{tpu_custom_call.1} parent=31 // pred_check
          %p333 = pneg %p124
        $region38: #{tpu_custom_call.1} parent=31 // pred_check_branch
          %335 = sbr.rel (%p333) target = $region40
        $region39: #{tpu_custom_call.1} parent=31 // pred_region
          %s336 = smul.u32 2, %s27
          %s338 = ssub.s32 32, 32
          %339 = vsyncadd %s329, %s338
          %s340 = smul.addr %s26, 2
          %s341 = sadd.s32 %s336, %s340
          %s342 = smul.addr %s341, 16
          %s343 = scalar_lea.hbm %s3, %s342
          %s345 = sshll.u32 %s332, 4
          %s346 = int_to_ptr.vmem [resolvable:$true] %s345
          %348 = dma.vmem_to_hbm [thread:$0]  %s346, 32, %s343, %s329
        $region40: #{tpu_custom_call.1} parent=31 // pred_fallthru
          _
      $region32: #{tpu_custom_call.1} parent=5 // pred_fallthru
        _
      %p349 = scmp.le.s32.totalorder 2, %s17
      // Predicated region
      $region41: #{tpu_custom_call.1} parent=5 // pred_check
        %p350 = pneg %p349
      $region42: #{tpu_custom_call.1} parent=5 // pred_check_branch
        %352 = sbr.rel (%p350) target = $region44
      $region43: #{tpu_custom_call.1} parent=5 // pred_region
        %s353 = ssub.s32 %s17, 2
        // Predicated region
        $region45: #{tpu_custom_call.1} parent=43 // pred_check
          %p354 = pneg %p130
        $region46: #{tpu_custom_call.1} parent=43 // pred_check_branch
          %356 = sbr.rel (%p354) target = $region48
        $region47: #{tpu_custom_call.1} parent=43 // pred_region
          %s357 = sand.u32 %s115, 1
          %s358 = scalar_lea.sflag [#allocation5], %s357
          %s359 = sand.u32 %s115, 1
          %s360 = smul.addr %s359, 2
          %s361 = scalar_lea.vmem [#allocation6], %s360
          %362 = dma.done %s358, 32
        $region48: #{tpu_custom_call.1} parent=43 // pred_fallthru
          _
      $region44: #{tpu_custom_call.1} parent=5 // pred_fallthru
        _
    $region6: #{tpu_custom_call.1} parent=1 // loop_footer
      %s21 = sadd.s32 1, %s17
    $region7: #{tpu_custom_call.1} parent=1 // loop_footer_branch
      %16 = sbr.rel target = $region3
    $region8: #{tpu_custom_call.1} parent=1 // loop_exit
      _
    %363 = vsyncpa [#allocation4], 1
    %s364 = scalar_lea.sflag [#allocation4], 1
    %365 = vsyncpa %s364, 1
    %366 = vsyncpa [#allocation5], 1
    %s367 = scalar_lea.sflag [#allocation5], 1
    %368 = vsyncpa %s367, 1

</llo_original>
